<compile_context>
chip_gen: v7x
topology: tpu7x:2x2x1
jax: 0.10.0
libtpu: 0.0.40
codegen_flags: <defaults>
</compile_context>

<pallas_src>
import functools

import jax
import jax.numpy as jnp
from jax.experimental import pallas as pl
from jax.experimental.pallas import tpu as pltpu

F_PAD = 128            # per-relation lane-dense feature width (covers in=16, hid=32, out=16)
F2 = 2 * F_PAD         # packed two-relation width -> fills the 256-wide MXU on v6e/v7x


# ----------------------------- Pallas kernel -------------------------------

def fused_rgcn_linkpred_kernel(
    a_bd_ref,      # bf16 [N, N]     block adjacency over stacked [user | item] nodes
    x_ref,         # bf16 [N, 2F]    stacked src features (user rows: lanes 0:F, item rows: F:2F)
    w1_ref,        # bf16 [2F, 2F]   blockdiag(W1_click, W1_clicked-by)
    b1_ref,        # f32  [N, 2F]    per-row bias, zeros in the halves never read
    w2_ref,        # bf16 [2F, 2F]   anti-blockdiag(W2_click / W2_clicked-by)
    b2_ref,        # f32  [N, 2F]
    u_idx_ref,     # int32 [1, n_e_pad]  user index per edge (positives then negatives)
    v_idx_ref,     # int32 [1, n_e_pad]  item index per edge
    scores_ref,    # f32  [1, n_e_pad]   lane-dense output
    *, n_user, n_item,
):
    f32 = jnp.float32
    bf16 = jnp.bfloat16
    F = F_PAD

    a_bd = a_bd_ref[...]

    # ---- RGCN layer 1: both relations in one 256-lane block-diag matmul ------------
    #   rows 0:n_user  -> h1_user = A_cb    @ (x_item @ W1_cb)    + b1_cb    (lanes F:2F)
    #   rows n_user:N  -> h1_item = A_click @ (x_user @ W1_click) + b1_click (lanes 0:F)
    xw1 = jnp.dot(x_ref[...], w1_ref[...], preferred_element_type=f32)
    h1 = jnp.dot(a_bd, xw1.astype(bf16), preferred_element_type=f32) + b1_ref[...]
    h1 = jnp.maximum(h1, 0.0)                     # ReLU in f32

    # ---- RGCN layer 2: anti-block-diag W2 re-routes the halves, no data swap -------
    #   user rows: [relu(h1_user) @ W2_click, 0];  item rows: [0, relu(h1_item) @ W2_cb]
    xw2 = jnp.dot(h1.astype(bf16), w2_ref[...], preferred_element_type=f32)
    h2 = jnp.dot(a_bd, xw2.astype(bf16), preferred_element_type=f32) + b2_ref[...]

    # valid blocks of h2: user embeddings in lanes F:2F, item embeddings in lanes 0:F
    h2_user = h2[:n_user, F:].astype(bf16)                    # [n_user, F]
    h2_item = h2[n_user:n_user + n_item, :F].astype(bf16)     # [n_item, F]

    # ---- HeteroDotProductPredictor: score[e] = h2_user[u_e] . h2_item[v_e] ---------
    # bf16 operands / f32 accumulation; dot_general contracts on last dims (no transpose).
    s_mat = jax.lax.dot_general(h2_user, h2_item,
                                (((1,), (1,)), ((), ())),
                                preferred_element_type=f32)    # [n_user, n_item]

    n_e_pad = scores_ref.shape[1]
    v_onehot = (jax.lax.broadcasted_iota(jnp.int32, (n_item, n_e_pad), 0)
                == v_idx_ref[...]).astype(bf16)                # exact 0/1 in bf16
    u_onehot = (jax.lax.broadcasted_iota(jnp.int32, (n_user, n_e_pad), 0)
                == u_idx_ref[...]).astype(f32)
    t = jnp.dot(s_mat.astype(bf16), v_onehot, preferred_element_type=f32)  # [n_user, n_e_pad]
    # Padded lanes (>= n_e) carry u=v=0 -> a real (0,0) score; they are sliced off in the
    # wrapper and must never feed an unmasked in-kernel reduction.
    scores_ref[...] = jnp.sum(u_onehot * t, axis=0, keepdims=True)


# ------------------------------- JAX glue ----------------------------------

def dense_norm_adj(src, dst, n_src, n_dst):
    """Dense symmetric-normalized adjacency A_norm[d, s] (DGL GraphConv norm='both')."""
    A = jnp.zeros((n_dst, n_src), dtype=jnp.float32).at[dst, src].add(1.0)
    deg_out = jnp.clip(A.sum(axis=0), 1.0, None)   # out-degree of src nodes
    deg_in = jnp.clip(A.sum(axis=1), 1.0, None)    # in-degree of dst nodes
    return A / jnp.sqrt(deg_in[:, None] * deg_out[None, :])


def pack_graph(A_click, A_cb):
    """Block adjacency over stacked nodes [user | item]: done once per graph."""
    n_item, n_user = A_click.shape
    N = n_user + n_item
    A_bd = jnp.zeros((N, N), jnp.float32)
    A_bd = A_bd.at[:n_user, n_user:].set(A_cb)      # dst user <- src item ('clicked-by')
    A_bd = A_bd.at[n_user:, :n_user].set(A_click)   # dst item <- src user ('click')
    return A_bd.astype(jnp.bfloat16)


def pack_params(params, n_user, n_item):
    """Pack weights/biases into the block-diag layout ONCE (outside the hot path)."""
    F = F_PAD
    N = n_user + n_item

    def put(dst, arr, r0, c0):
        return dst.at[r0:r0 + arr.shape[0], c0:c0 + arr.shape[1]].set(arr)

    w1c, b1c = params["conv1"]["click"]["W"], params["conv1"]["click"]["b"]
    w1r, b1r = params["conv1"]["clicked-by"]["W"], params["conv1"]["clicked-by"]["b"]
    w2c, b2c = params["conv2"]["click"]["W"], params["conv2"]["click"]["b"]
    w2r, b2r = params["conv2"]["clicked-by"]["W"], params["conv2"]["clicked-by"]["b"]

    # Layer 1: block-diagonal (input lanes 0:F -> W_click, lanes F:2F -> W_cb).
    W1 = jnp.zeros((F2, F2), jnp.float32)
    W1 = put(W1, w1c, 0, 0)
    W1 = put(W1, w1r, F, F)

    # Layer 2: anti-block-diagonal so h1 halves are routed without a lane swap:
    #   result = [x_hi @ W2_click (lanes 0:F), x_lo @ W2_cb (lanes F:2F)].
    W2 = jnp.zeros((F2, F2), jnp.float32)
    W2 = put(W2, w2c, F, 0)     # W2_click
    W2 = put(W2, w2r, 0, F)     # W2_clicked-by

    # Per-row biases; zeros in the halves the packed layout never reads keep them exact 0.
    b1 = jnp.zeros((N, F2), jnp.float32)
    b1 = put(b1, jnp.broadcast_to(b1r, (n_user, b1r.shape[1])), 0, F)       # dst user
    b1 = put(b1, jnp.broadcast_to(b1c, (n_item, b1c.shape[1])), n_user, 0)  # dst item
    b2 = jnp.zeros((N, F2), jnp.float32)
    b2 = put(b2, jnp.broadcast_to(b2r, (n_user, b2r.shape[1])), 0, F)
    b2 = put(b2, jnp.broadcast_to(b2c, (n_item, b2c.shape[1])), n_user, 0)

    return {"W1": W1.astype(jnp.bfloat16), "W2": W2.astype(jnp.bfloat16),
            "b1": b1, "b2": b2}


@jax.jit
def model_forward(A_bd, packed, x_user, x_item, pos_u, pos_v, neg_u, neg_v):
    F = F_PAD
    bf16 = jnp.bfloat16
    n_user, n_item = x_user.shape[0], x_item.shape[0]
    n_pos, n_neg = pos_u.shape[0], neg_u.shape[0]
    n_e = n_pos + n_neg
    n_e_pad = ((n_e + 127) // 128) * 128

    # Stacked source features: user rows carry lanes 0:F, item rows carry lanes F:2F.
    xu = jnp.pad(x_user, ((0, 0), (0, F2 - x_user.shape[1])))
    xi = jnp.pad(x_item, ((0, 0), (F, F - x_item.shape[1])))
    x_stack = jnp.concatenate([xu, xi], axis=0).astype(bf16)

    # Lane-dense int32 edge-endpoint slabs: positives then negatives, zero-padded.
    u_all = jnp.pad(jnp.concatenate([pos_u, neg_u]),
                    (0, n_e_pad - n_e)).astype(jnp.int32).reshape(1, n_e_pad)
    v_all = jnp.pad(jnp.concatenate([pos_v, neg_v]),
                    (0, n_e_pad - n_e)).astype(jnp.int32).reshape(1, n_e_pad)

    vmem = pl.BlockSpec(memory_space=pltpu.MemorySpace.VMEM)
    kernel = functools.partial(fused_rgcn_linkpred_kernel,
                               n_user=n_user, n_item=n_item)
    scores = pl.pallas_call(
        kernel,
        out_shape=jax.ShapeDtypeStruct((1, n_e_pad), jnp.float32),
        in_specs=[vmem] * 8,
        out_specs=vmem,
    )(A_bd, x_stack, packed["W1"], packed["b1"], packed["W2"], packed["b2"],
      u_all, v_all)

    pos_score = scores[0, :n_pos].reshape(n_pos, 1)
    neg_score = scores[0, n_pos:n_e].reshape(n_neg, 1)
    return pos_score, neg_score


def reference_forward(A_click, A_cb, x_user, x_item, params, pos_u, pos_v, neg_u, neg_v):
    """Pure f32 JAX reference of the DGL model (for a loose sanity check)."""
    def conv(A, X, p):
        return A @ (X @ p["W"]) + p["b"]
    h1_item = jax.nn.relu(conv(A_click, x_user, params["conv1"]["click"]))
    h1_user = jax.nn.relu(conv(A_cb, x_item, params["conv1"]["clicked-by"]))
    h2_item = conv(A_click, h1_user, params["conv2"]["click"])
    h2_user = conv(A_cb, h1_item, params["conv2"]["clicked-by"])
    pos = jnp.sum(h2_user[pos_u] * h2_item[pos_v], axis=-1, keepdims=True)
    neg = jnp.sum(h2_user[neg_u] * h2_item[neg_v], axis=-1, keepdims=True)
    return pos, neg


# --------------------------------- main -------------------------------------

if __name__ == "__main__":
    key = jax.random.PRNGKey(0)
    ks = jax.random.split(key, 14)

    # Small synthetic heterogeneous graph: 'user' and 'item' node types.
    n_user, n_item = 8, 16
    in_feats, hid_feats, out_feats = 16, 32, 16
    n_pos = 24
    k = 5  # negative edges per positive edge

    # Positive edges of relation 'click' (user -> item); 'clicked-by' is its reverse.
    src_pos = jax.random.randint(ks[0], (n_pos,), 0, n_user)
    dst_pos = jax.random.randint(ks[1], (n_pos,), 0, n_item)
    # Negative graph for etype 'click': same src repeated k times, random dst items.
    neg_src = jnp.repeat(src_pos, k)
    neg_dst = jax.random.randint(ks[2], (n_pos * k,), 0, n_item)

    A_click = dense_norm_adj(src_pos, dst_pos, n_user, n_item)      # [n_item, n_user]
    A_cb = dense_norm_adj(dst_pos, src_pos, n_item, n_user)         # [n_user, n_item]

    # Node features.
    x_user = jax.random.normal(ks[3], (n_user, in_feats), jnp.float32)
    x_item = jax.random.normal(ks[4], (n_item, in_feats), jnp.float32)

    # Parameters (DGL GraphConv weight shape: [in, out], bias: [out]).
    def init_layer(kw, kb, fin, fout):
        W = jax.random.normal(kw, (fin, fout), jnp.float32) * (1.0 / jnp.sqrt(fin))
        b = jax.random.normal(kb, (1, fout), jnp.float32) * 0.01
        return {"W": W, "b": b}

    params = {
        "conv1": {
            "click": init_layer(ks[5], ks[6], in_feats, hid_feats),
            "clicked-by": init_layer(ks[7], ks[8], in_feats, hid_feats),
        },
        "conv2": {
            "click": init_layer(ks[9], ks[10], hid_feats, out_feats),
            "clicked-by": init_layer(ks[11], ks[12], hid_feats, out_feats),
        },
    }

    # One-time packing (graph + params) outside the jitted per-step forward.
    A_bd = pack_graph(A_click, A_cb)
    packed = pack_params(params, n_user, n_item)

    pos_score, neg_score = model_forward(
        A_bd, packed, x_user, x_item, src_pos, dst_pos, neg_src, neg_dst)
    jax.block_until_ready((pos_score, neg_score))

    assert pos_score.shape == (n_pos, 1)
    assert neg_score.shape == (n_pos * k, 1)
    assert bool(jnp.all(jnp.isfinite(pos_score))) and bool(jnp.all(jnp.isfinite(neg_score)))

    # Loose sanity check vs. f32 reference (kernel runs A/X/W in bf16 with f32 accumulation).
    ref_pos, ref_neg = reference_forward(
        A_click, A_cb, x_user, x_item, params, src_pos, dst_pos, neg_src, neg_dst)
    scale = jnp.maximum(1.0, jnp.maximum(jnp.max(jnp.abs(ref_pos)), jnp.max(jnp.abs(ref_neg))))
    err = jnp.maximum(jnp.max(jnp.abs(pos_score - ref_pos)),
                      jnp.max(jnp.abs(neg_score - ref_neg))) / scale
    assert float(err) < 0.1, f"normalized error too large: {float(err)}"

    print("KERNEL_OK")
</pallas_src>

<mosaic_0001>
module attributes {stable_mosaic.version = 11 : i64} {
  func.func @fused_rgcn_linkpred_kernel(%arg0: memref<24x24xbf16, #tpu.memory_space<vmem>>, %arg1: memref<24x256xbf16, #tpu.memory_space<vmem>>, %arg2: memref<256x256xbf16, #tpu.memory_space<vmem>>, %arg3: memref<24x256xf32, #tpu.memory_space<vmem>>, %arg4: memref<256x256xbf16, #tpu.memory_space<vmem>>, %arg5: memref<24x256xf32, #tpu.memory_space<vmem>>, %arg6: memref<1x256xi32, #tpu.memory_space<vmem>>, %arg7: memref<1x256xi32, #tpu.memory_space<vmem>>, %arg8: memref<1x256xf32, #tpu.memory_space<vmem>>) attributes {dimension_semantics = [], scalar_prefetch = 0 : i64, scratch_operands = 0 : i64, tpu.core_type = #tpu.core_type<tc>} {
    %c0 = arith.constant 0 : index
    %c0_0 = arith.constant 0 : index
    %0 = vector.load %arg0[%c0, %c0_0] : memref<24x24xbf16, #tpu.memory_space<vmem>>, vector<24x24xbf16>
    %c0_1 = arith.constant 0 : index
    %c0_2 = arith.constant 0 : index
    %1 = vector.load %arg1[%c0_1, %c0_2] : memref<24x256xbf16, #tpu.memory_space<vmem>>, vector<24x256xbf16>
    %c0_3 = arith.constant 0 : index
    %c0_4 = arith.constant 0 : index
    %2 = vector.load %arg2[%c0_3, %c0_4] : memref<256x256xbf16, #tpu.memory_space<vmem>>, vector<256x256xbf16>
    %cst = arith.constant dense<0.000000e+00> : vector<24x256xf32>
    %3 = tpu.matmul %1, %2, %cst {dimension_numbers = #tpu.dot_dimension_numbers<[1], [0], [0], [1], [0, 0, 1, 1], [], []>} : vector<24x256xbf16>, vector<256x256xbf16>, vector<24x256xf32> -> vector<24x256xf32>
    %4 = arith.truncf %3 : vector<24x256xf32> to vector<24x256xbf16>
    %cst_5 = arith.constant dense<0.000000e+00> : vector<24x256xf32>
    %5 = tpu.matmul %0, %4, %cst_5 {dimension_numbers = #tpu.dot_dimension_numbers<[1], [0], [0], [1], [0, 0, 1, 1], [], []>} : vector<24x24xbf16>, vector<24x256xbf16>, vector<24x256xf32> -> vector<24x256xf32>
    %c0_6 = arith.constant 0 : index
    %c0_7 = arith.constant 0 : index
    %6 = vector.load %arg3[%c0_6, %c0_7] : memref<24x256xf32, #tpu.memory_space<vmem>>, vector<24x256xf32>
    %7 = arith.addf %5, %6 : vector<24x256xf32>
    %cst_8 = arith.constant 0.000000e+00 : f32
    %8 = vector.broadcast %cst_8 : f32 to vector<24x256xf32>
    %9 = arith.maximumf %7, %8 : vector<24x256xf32>
    %10 = arith.truncf %9 : vector<24x256xf32> to vector<24x256xbf16>
    %c0_9 = arith.constant 0 : index
    %c0_10 = arith.constant 0 : index
    %11 = vector.load %arg4[%c0_9, %c0_10] : memref<256x256xbf16, #tpu.memory_space<vmem>>, vector<256x256xbf16>
    %cst_11 = arith.constant dense<0.000000e+00> : vector<24x256xf32>
    %12 = tpu.matmul %10, %11, %cst_11 {dimension_numbers = #tpu.dot_dimension_numbers<[1], [0], [0], [1], [0, 0, 1, 1], [], []>} : vector<24x256xbf16>, vector<256x256xbf16>, vector<24x256xf32> -> vector<24x256xf32>
    %13 = arith.truncf %12 : vector<24x256xf32> to vector<24x256xbf16>
    %cst_12 = arith.constant dense<0.000000e+00> : vector<24x256xf32>
    %14 = tpu.matmul %0, %13, %cst_12 {dimension_numbers = #tpu.dot_dimension_numbers<[1], [0], [0], [1], [0, 0, 1, 1], [], []>} : vector<24x24xbf16>, vector<24x256xbf16>, vector<24x256xf32> -> vector<24x256xf32>
    %c0_13 = arith.constant 0 : index
    %c0_14 = arith.constant 0 : index
    %15 = vector.load %arg5[%c0_13, %c0_14] : memref<24x256xf32, #tpu.memory_space<vmem>>, vector<24x256xf32>
    %16 = arith.addf %14, %15 : vector<24x256xf32>
    %17 = vector.extract_strided_slice %16 {offsets = [0, 128], sizes = [8, 128], strides = [1, 1]} : vector<24x256xf32> to vector<8x128xf32>
    %18 = arith.truncf %17 : vector<8x128xf32> to vector<8x128xbf16>
    %19 = vector.extract_strided_slice %16 {offsets = [8, 0], sizes = [16, 128], strides = [1, 1]} : vector<24x256xf32> to vector<16x128xf32>
    %20 = arith.truncf %19 : vector<16x128xf32> to vector<16x128xbf16>
    %cst_15 = arith.constant dense<0.000000e+00> : vector<8x16xf32>
    %21 = tpu.matmul %18, %20, %cst_15 {dimension_numbers = #tpu.dot_dimension_numbers<[1], [1], [0], [0], [0, 0, 1, 0], [], []>} : vector<8x128xbf16>, vector<16x128xbf16>, vector<8x16xf32> -> vector<8x16xf32>
    %22 = tpu.iota {dimensions = array<i32: 0>} : vector<16x256xi32>
    %c0_16 = arith.constant 0 : index
    %c0_17 = arith.constant 0 : index
    %23 = vector.load %arg7[%c0_16, %c0_17] : memref<1x256xi32, #tpu.memory_space<vmem>>, vector<1x256xi32>
    %24 = vector.broadcast %23 : vector<1x256xi32> to vector<16x256xi32>
    %25 = arith.cmpi eq, %22, %24 : vector<16x256xi32>
    %26 = arith.extui %25 : vector<16x256xi1> to vector<16x256xi32>
    %27 = arith.sitofp %26 : vector<16x256xi32> to vector<16x256xf32>
    %28 = arith.truncf %27 : vector<16x256xf32> to vector<16x256xbf16>
    %29 = tpu.iota {dimensions = array<i32: 0>} : vector<8x256xi32>
    %c0_18 = arith.constant 0 : index
    %c0_19 = arith.constant 0 : index
    %30 = vector.load %arg6[%c0_18, %c0_19] : memref<1x256xi32, #tpu.memory_space<vmem>>, vector<1x256xi32>
    %31 = vector.broadcast %30 : vector<1x256xi32> to vector<8x256xi32>
    %32 = arith.cmpi eq, %29, %31 : vector<8x256xi32>
    %33 = arith.extui %32 : vector<8x256xi1> to vector<8x256xi32>
    %34 = arith.sitofp %33 : vector<8x256xi32> to vector<8x256xf32>
    %35 = arith.truncf %21 : vector<8x16xf32> to vector<8x16xbf16>
    %cst_20 = arith.constant dense<0.000000e+00> : vector<8x256xf32>
    %36 = tpu.matmul %35, %28, %cst_20 {dimension_numbers = #tpu.dot_dimension_numbers<[1], [0], [0], [1], [0, 0, 1, 1], [], []>} : vector<8x16xbf16>, vector<16x256xbf16>, vector<8x256xf32> -> vector<8x256xf32>
    %37 = arith.mulf %34, %36 : vector<8x256xf32>
    %cst_21 = arith.constant dense<0.000000e+00> : vector<256xf32>
    %38 = vector.multi_reduction <add>, %37, %cst_21 [0] : vector<8x256xf32> to vector<256xf32>
    %39 = vector.shape_cast %38 : vector<256xf32> to vector<1x256xf32>
    %c0_22 = arith.constant 0 : index
    %c0_23 = arith.constant 0 : index
    %40 = vector.load %arg8[%c0_22, %c0_23] : memref<1x256xf32, #tpu.memory_space<vmem>>, vector<1x256xf32>
    tpu.vector_store %arg8[%c0_22, %c0_23], %39 {strides = array<i32>} : memref<1x256xf32, #tpu.memory_space<vmem>>, vector<1x256xf32>,
    return
  }
}

</mosaic_0001>

<llo_original>
// kernel: model_forward.1
$region0: #{model_forward.1}
  #allocation0 [shape = 'u32[]', space=smem, size = 0x4, offset = 0x4, fixed_abs, tag = 'smem constant byte address 0x4 - core index']
  #allocation1 [shape = 'u32[144,128]{1,0:T(1,128)}', space=vmem, size = 0x12000, scoped, tag = 'internal scratch']
  %s0 = inlined_call_operand.vmem [shape: bf16[24,24], index: 0, kind: input, shape index: {}]
  %s1 = inlined_call_operand.vmem [shape: bf16[24,256], index: 1, kind: input, shape index: {}]
  %s2 = inlined_call_operand.hbm [shape: bf16[256,256], index: 2, kind: input, shape index: {}]
  %s3 = inlined_call_operand.vmem [shape: f32[24,256], index: 3, kind: input, shape index: {}]
  %s4 = inlined_call_operand.hbm [shape: bf16[256,256], index: 4, kind: input, shape index: {}]
  %s5 = inlined_call_operand.vmem [shape: f32[24,256], index: 5, kind: input, shape index: {}]
  %s6 = inlined_call_operand.vmem [shape: s32[1,256], index: 6, kind: input, shape index: {}]
  %s7 = inlined_call_operand.vmem [shape: s32[1,256], index: 7, kind: input, shape index: {}]
  %s8 = inlined_call_operand.vmem [shape: f32[1,256], index: 8, kind: output, shape index: {}]
  %s9 = sld [smem:[#allocation0]]
  $region50: #{model_forward.1} parent=0
    _
  %s11 = ssub.s32 1, %s9
  %s12 = scalar_select 0, %s11, %s9
  $region1: #{model_forward.1} parent=0
    #allocation2 [shape = 'u8[131072]{0}', space=vmem, size = 0x20000, scoped, tag = 'input window, operand 2, single buffered']
    #allocation3 [shape = 's32[1]{0}', space=sflag, size = 0x4, scoped, tag = 'scoped memory for model_forward.1']
    #allocation4 [shape = 'u8[131072]{0}', space=vmem, size = 0x20000, scoped, tag = 'input window, operand 4, single buffered']
    #allocation5 [shape = 's32[1]{0}', space=sflag, size = 0x4, scoped, tag = 'scoped memory for model_forward.1']
    %13 = vsyncpa [#allocation3], 0
    %14 = vsyncpa [#allocation5], 0
    // Predicated region
    $region2: #{model_forward.1} parent=1 // pred_check
      _
    $region3: #{model_forward.1} parent=1 // pred_check_branch
      %16 = sbr.rel (0) target = $region5
    $region4: #{model_forward.1} parent=1 // pred_region
      _
    $region5: #{model_forward.1} parent=1 // pred_fallthru
      _
    // Predicated region
    $region6: #{model_forward.1} parent=1 // pred_check
      _
    $region7: #{model_forward.1} parent=1 // pred_check_branch
      %18 = sbr.rel (0) target = $region9
    $region8: #{model_forward.1} parent=1 // pred_region
      _
    $region9: #{model_forward.1} parent=1 // pred_fallthru
      _
    // Predicated region
    $region10: #{model_forward.1} parent=1 // pred_check
      _
    $region11: #{model_forward.1} parent=1 // pred_check_branch
      %20 = sbr.rel (0) target = $region13
    $region12: #{model_forward.1} parent=1 // pred_region
      %s22 = ssub.s32 4096, 4096
      %23 = vsyncadd [#allocation3], %s22
      %s24 = sshll.u32 [#allocation2], 4
      %s25 = int_to_ptr.vmem [resolvable:$true] %s24
      %30 = dma.hbm_to_vmem [thread:$0]  %s2, 4096, %s25, [#allocation3], 128, 128, 8
    $region13: #{model_forward.1} parent=1 // pred_fallthru
      _
    // Predicated region
    $region14: #{model_forward.1} parent=1 // pred_check
      _
    $region15: #{model_forward.1} parent=1 // pred_check_branch
      %32 = sbr.rel (0) target = $region17
    $region16: #{model_forward.1} parent=1 // pred_region
      _
    $region17: #{model_forward.1} parent=1 // pred_fallthru
      _
    // Predicated region
    $region18: #{model_forward.1} parent=1 // pred_check
      _
    $region19: #{model_forward.1} parent=1 // pred_check_branch
      %34 = sbr.rel (0) target = $region21
    $region20: #{model_forward.1} parent=1 // pred_region
      %s36 = ssub.s32 4096, 4096
      %37 = vsyncadd [#allocation5], %s36
      %s38 = sshll.u32 [#allocation4], 4
      %s39 = int_to_ptr.vmem [resolvable:$true] %s38
      %44 = dma.hbm_to_vmem [thread:$0]  %s4, 4096, %s39, [#allocation5], 128, 128, 8
    $region21: #{model_forward.1} parent=1 // pred_fallthru
      _
    // Predicated region
    $region22: #{model_forward.1} parent=1 // pred_check
      _
    $region23: #{model_forward.1} parent=1 // pred_check_branch
      %46 = sbr.rel (0) target = $region25
    $region24: #{model_forward.1} parent=1 // pred_region
      _
    $region25: #{model_forward.1} parent=1 // pred_fallthru
      _
    // Predicated region
    $region26: #{model_forward.1} parent=1 // pred_check
      _
    $region27: #{model_forward.1} parent=1 // pred_check_branch
      %48 = sbr.rel (0) target = $region29
    $region28: #{model_forward.1} parent=1 // pred_region
      _
    $region29: #{model_forward.1} parent=1 // pred_fallthru
      _
    // Predicated region
    $region30: #{model_forward.1} parent=1 // pred_check
      _
    $region31: #{model_forward.1} parent=1 // pred_check_branch
      %50 = sbr.rel (0) target = $region33
    $region32: #{model_forward.1} parent=1 // pred_region
      _
    $region33: #{model_forward.1} parent=1 // pred_fallthru
      _
    // Predicated region
    $region34: #{model_forward.1} parent=1 // pred_check
      _
    $region35: #{model_forward.1} parent=1 // pred_check_branch
      %52 = sbr.rel (0) target = $region37
    $region36: #{model_forward.1} parent=1 // pred_region
      %53 = dma.done [#allocation3], 4096
    $region37: #{model_forward.1} parent=1 // pred_fallthru
      _
    // Predicated region
    $region38: #{model_forward.1} parent=1 // pred_check
      _
    $region39: #{model_forward.1} parent=1 // pred_check_branch
      %55 = sbr.rel (0) target = $region41
    $region40: #{model_forward.1} parent=1 // pred_region
      %56 = dma.done [#allocation5], 4096
    $region41: #{model_forward.1} parent=1 // pred_fallthru
      _
    %v58 = vld [vmem:[%s0] sm:$0xf]
    %v59 = vld [vmem:[%s0 + $0x4] sm:$0xf]
    %v60 = vld [vmem:[%s0 + $0x8] sm:$0xf]
    %v61 = vld [vmem:[%s1] sm:$0xff]
    %v62 = vld [vmem:[%s1 + $0x8] sm:$0xff]
    %v63 = vld [vmem:[%s1 + $0x10] sm:$0xff]
    %v64 = vld [vmem:[#allocation2] sm:$0xff]
    %v65 = vld [vmem:[#allocation2 + $0x8] sm:$0xff]
    %v66 = vld [vmem:[#allocation2 + $0x10] sm:$0xff]
    %v67 = vld [vmem:[#allocation2 + $0x18] sm:$0xff]
    %v68 = vld [vmem:[#allocation2 + $0x20] sm:$0xff]
    %v69 = vld [vmem:[#allocation2 + $0x28] sm:$0xff]
    %v70 = vld [vmem:[#allocation2 + $0x30] sm:$0xff]
    %v71 = vld [vmem:[#allocation2 + $0x38] sm:$0xff]
    %v72 = vld [vmem:[#allocation2 + $0x40] sm:$0xff]
    %v73 = vld [vmem:[#allocation2 + $0x48] sm:$0xff]
    %v74 = vld [vmem:[#allocation2 + $0x50] sm:$0xff]
    %v75 = vld [vmem:[#allocation2 + $0x58] sm:$0xff]
    %v76 = vld [vmem:[#allocation2 + $0x60] sm:$0xff]
    %v77 = vld [vmem:[#allocation2 + $0x68] sm:$0xff]
    %v78 = vld [vmem:[#allocation2 + $0x70] sm:$0xff]
    %v79 = vld [vmem:[#allocation2 + $0x78] sm:$0xff]
    %v80 = vld [vmem:[#allocation2 + $0x80] sm:$0xff]
    %v81 = vld [vmem:[#allocation2 + $0x88] sm:$0xff]
    %v82 = vld [vmem:[#allocation2 + $0x90] sm:$0xff]
    %v83 = vld [vmem:[#allocation2 + $0x98] sm:$0xff]
    %v84 = vld [vmem:[#allocation2 + $0xa0] sm:$0xff]
    %v85 = vld [vmem:[#allocation2 + $0xa8] sm:$0xff]
    %v86 = vld [vmem:[#allocation2 + $0xb0] sm:$0xff]
    %v87 = vld [vmem:[#allocation2 + $0xb8] sm:$0xff]
    %v88 = vld [vmem:[#allocation2 + $0xc0] sm:$0xff]
    %v89 = vld [vmem:[#allocation2 + $0xc8] sm:$0xff]
    %v90 = vld [vmem:[#allocation2 + $0xd0] sm:$0xff]
    %v91 = vld [vmem:[#allocation2 + $0xd8] sm:$0xff]
    %v92 = vld [vmem:[#allocation2 + $0xe0] sm:$0xff]
    %v93 = vld [vmem:[#allocation2 + $0xe8] sm:$0xff]
    %v94 = vld [vmem:[#allocation2 + $0xf0] sm:$0xff]
    %v95 = vld [vmem:[#allocation2 + $0xf8] sm:$0xff]
    %v99 = vunpack.c.l.b16 %v61
    %v100 = vunpack.c.h.b16 %v61
    %v101 = vunpack.c.l.b16 %v62
    %v102 = vunpack.c.h.b16 %v62
    %v103 = vunpack.c.l.b16 %v63
    %v104 = vunpack.c.h.b16 %v63
    %v105 = vpack.c.b16 %v101, %v99
    %v106 = vpack.c.b16 %v102, %v100
    %v107 = vpack.c.b16 %v103, %v103
    %v108 = vpack.c.b16 %v104, %v104
    %v145 = vunpack.c.l.b16 %v64
    %v146 = vunpack.c.h.b16 %v64
    %v147 = vunpack.c.l.b16 %v65
    %v148 = vunpack.c.h.b16 %v65
    %v149 = vunpack.c.l.b16 %v66
    %v150 = vunpack.c.h.b16 %v66
    %v151 = vunpack.c.l.b16 %v67
    %v152 = vunpack.c.h.b16 %v67
    %v153 = vunpack.c.l.b16 %v68
    %v154 = vunpack.c.h.b16 %v68
    %v155 = vunpack.c.l.b16 %v69
    %v156 = vunpack.c.h.b16 %v69
    %v157 = vunpack.c.l.b16 %v70
    %v158 = vunpack.c.h.b16 %v70
    %v159 = vunpack.c.l.b16 %v71
    %v160 = vunpack.c.h.b16 %v71
    %v161 = vunpack.c.l.b16 %v72
    %v162 = vunpack.c.h.b16 %v72
    %v163 = vunpack.c.l.b16 %v73
    %v164 = vunpack.c.h.b16 %v73
    %v165 = vunpack.c.l.b16 %v74
    %v166 = vunpack.c.h.b16 %v74
    %v167 = vunpack.c.l.b16 %v75
    %v168 = vunpack.c.h.b16 %v75
    %v169 = vunpack.c.l.b16 %v76
    %v170 = vunpack.c.h.b16 %v76
    %v171 = vunpack.c.l.b16 %v77
    %v172 = vunpack.c.h.b16 %v77
    %v173 = vunpack.c.l.b16 %v78
    %v174 = vunpack.c.h.b16 %v78
    %v175 = vunpack.c.l.b16 %v79
    %v176 = vunpack.c.h.b16 %v79
    %v177 = vunpack.c.l.b16 %v80
    %v178 = vunpack.c.h.b16 %v80
    %v179 = vunpack.c.l.b16 %v81
    %v180 = vunpack.c.h.b16 %v81
    %v181 = vunpack.c.l.b16 %v82
    %v182 = vunpack.c.h.b16 %v82
    %v183 = vunpack.c.l.b16 %v83
    %v184 = vunpack.c.h.b16 %v83
    %v185 = vunpack.c.l.b16 %v84
    %v186 = vunpack.c.h.b16 %v84
    %v187 = vunpack.c.l.b16 %v85
    %v188 = vunpack.c.h.b16 %v85
    %v189 = vunpack.c.l.b16 %v86
    %v190 = vunpack.c.h.b16 %v86
    %v191 = vunpack.c.l.b16 %v87
    %v192 = vunpack.c.h.b16 %v87
    %v193 = vunpack.c.l.b16 %v88
    %v194 = vunpack.c.h.b16 %v88
    %v195 = vunpack.c.l.b16 %v89
    %v196 = vunpack.c.h.b16 %v89
    %v197 = vunpack.c.l.b16 %v90
    %v198 = vunpack.c.h.b16 %v90
    %v199 = vunpack.c.l.b16 %v91
    %v200 = vunpack.c.h.b16 %v91
    %v201 = vunpack.c.l.b16 %v92
    %v202 = vunpack.c.h.b16 %v92
    %v203 = vunpack.c.l.b16 %v93
    %v204 = vunpack.c.h.b16 %v93
    %v205 = vunpack.c.l.b16 %v94
    %v206 = vunpack.c.h.b16 %v94
    %v207 = vunpack.c.l.b16 %v95
    %v208 = vunpack.c.h.b16 %v95
    %v209 = vpack.c.b16 %v147, %v145
    %v210 = vpack.c.b16 %v148, %v146
    %v211 = vpack.c.b16 %v151, %v149
    %v212 = vpack.c.b16 %v152, %v150
    %v213 = vpack.c.b16 %v155, %v153
    %v214 = vpack.c.b16 %v156, %v154
    %v215 = vpack.c.b16 %v159, %v157
    %v216 = vpack.c.b16 %v160, %v158
    %v217 = vpack.c.b16 %v163, %v161
    %v218 = vpack.c.b16 %v164, %v162
    %v219 = vpack.c.b16 %v167, %v165
    %v220 = vpack.c.b16 %v168, %v166
    %v221 = vpack.c.b16 %v171, %v169
    %v222 = vpack.c.b16 %v172, %v170
    %v223 = vpack.c.b16 %v175, %v173
    %v224 = vpack.c.b16 %v176, %v174
    %v225 = vpack.c.b16 %v179, %v177
    %v226 = vpack.c.b16 %v180, %v178
    %v227 = vpack.c.b16 %v183, %v181
    %v228 = vpack.c.b16 %v184, %v182
    %v229 = vpack.c.b16 %v187, %v185
    %v230 = vpack.c.b16 %v188, %v186
    %v231 = vpack.c.b16 %v191, %v189
    %v232 = vpack.c.b16 %v192, %v190
    %v233 = vpack.c.b16 %v195, %v193
    %v234 = vpack.c.b16 %v196, %v194
    %v235 = vpack.c.b16 %v199, %v197
    %v236 = vpack.c.b16 %v200, %v198
    %v237 = vpack.c.b16 %v203, %v201
    %v238 = vpack.c.b16 %v204, %v202
    %v239 = vpack.c.b16 %v207, %v205
    %v240 = vpack.c.b16 %v208, %v206
    %273 = vmatprep.subr.bf16.mxu0 %v210
    %274 = vmatpush1.bf16.msra.mxu0 %v209
    %275 = vmatprep.subr.bf16.mxu0 %v212
    %276 = vmatpush1.bf16.msra.mxu0 %v211
    %277 = vmatprep.subr.bf16.mxu0 %v214
    %278 = vmatpush1.bf16.msra.mxu0 %v213
    %279 = vmatprep.subr.bf16.mxu0 %v216
    %280 = vmatpush1.bf16.msra.mxu0 %v215
    %281 = vmatprep.subr.bf16.mxu0 %v218
    %282 = vmatpush1.bf16.msra.mxu0 %v217
    %283 = vmatprep.subr.bf16.mxu0 %v220
    %284 = vmatpush1.bf16.msra.mxu0 %v219
    %285 = vmatprep.subr.bf16.mxu0 %v222
    %286 = vmatpush1.bf16.msra.mxu0 %v221
    %287 = vmatprep.subr.bf16.mxu0 %v224
    %288 = vmatpush1.bf16.msra.mxu0 %v223
    %289 = vmatprep.subr.bf16.mxu0 %v226
    %290 = vmatpush1.bf16.msra.mxu0 %v225
    %291 = vmatprep.subr.bf16.mxu0 %v228
    %292 = vmatpush1.bf16.msra.mxu0 %v227
    %293 = vmatprep.subr.bf16.mxu0 %v230
    %294 = vmatpush1.bf16.msra.mxu0 %v229
    %295 = vmatprep.subr.bf16.mxu0 %v232
    %296 = vmatpush1.bf16.msra.mxu0 %v231
    %297 = vmatprep.subr.bf16.mxu0 %v234
    %298 = vmatpush1.bf16.msra.mxu0 %v233
    %299 = vmatprep.subr.bf16.mxu0 %v236
    %300 = vmatpush1.bf16.msra.mxu0 %v235
    %301 = vmatprep.subr.bf16.mxu0 %v238
    %302 = vmatpush1.bf16.msra.mxu0 %v237
    %303 = vmatprep.subr.bf16.mxu0 %v240
    %304 = vmatpush1.bf16.msra.mxu0 %v239
    %305 = vmatprep.mubr.bf16.mxu0 %v106
    %306 = vmatmul.mubr.bf16.gmra.mrb[0].mxu0 %v105
    %v307 = vpop.f32.mrb[0].mxu0
    %v308 = vadd.f32 0.0, %v307
    %v309 = vpop.f32.mrb[0].mxu0
    %v310 = vadd.f32 0.0, %v309
    %v311 = vpop.f32.mrb[0].mxu0
    %v312 = vadd.f32 0.0, %v311
    %v313 = vpop.f32.mrb[0].mxu0
    %v314 = vadd.f32 0.0, %v313
    %315 = vmatprep.mubr.bf16.mxu0 %v108
    %316 = vmatmul.mubr.bf16.gmra.mrb[0].mxu0 %v107
    %v317 = vpop.f32.mrb[0].mxu0
    %v318 = vadd.f32 0.0, %v317
    %v319 = vpop.f32.mrb[0].mxu0
    %v320 = vadd.f32 0.0, %v319
    %v321 = vpop.f32.mrb[0].mxu0
    %v322 = vpop.f32.mrb[0].mxu0
    %323 = vdwg.mxu0
    %v324 = vpack.c.bf16 %v312, %v308
    %v325 = vpack.c.bf16 %v314, %v310
    %v326 = vpack.c.bf16 %v318, %v318
    %v327 = vpack.c.bf16 %v320, %v320
    %v328 = vld [vmem:[%s3] sm:$0xff]
    %v329 = vld [vmem:[%s3 + $0x8] sm:$0xff]
    %v330 = vld [vmem:[%s3 + $0x10] sm:$0xff]
    %v331 = vld [vmem:[%s3 + $0x18] sm:$0xff]
    %v332 = vld [vmem:[%s3 + $0x20] sm:$0xff]
    %v333 = vld [vmem:[%s3 + $0x28] sm:$0xff]
    %v337 = vunpack.c.l.b16 %v58
    %v338 = vunpack.c.l.b16 %v59
    %v339 = vunpack.c.l.b16 %v60
    %v340 = vpack.c.b16 %v338, %v337
    %v341 = vpack.c.b16 %v339, %v339
    %vm342 = vcmask 195584
    %v344 = vsel %vm342, %v340, 0
    %v347 = vsel %vm342, %v341, 0
    %vm349 = vcmask 1043456
    %v351 = vsel %vm349, %v326, 0
    %v354 = vsel %vm349, %v327, 0
    %356 = vmatprep.subr.bf16.mxu0 %v325
    %357 = vmatpush1.bf16.msra.mxu0 %v324
    %358 = vmatprep.subr.bf16.mxu0 %v354
    %359 = vmatpush1.bf16.msra.mxu0 %v351
    %360 = vmatprep.subr.bf16.mxu0 0
    %361 = vmatpush1.bf16.msra.mxu0 0
    %362 = vmatprep.subr.bf16.mxu0 0
    %363 = vmatpush1.bf16.msra.mxu0 0
    %364 = vmatprep.subr.bf16.mxu0 0
    %365 = vmatpush1.bf16.msra.mxu0 0
    %366 = vmatprep.subr.bf16.mxu0 0
    %367 = vmatpush1.bf16.msra.mxu0 0
    %368 = vmatprep.subr.bf16.mxu0 0
    %369 = vmatpush1.bf16.msra.mxu0 0
    %370 = vmatprep.subr.bf16.mxu0 0
    %371 = vmatpush1.bf16.msra.mxu0 0
    %372 = vmatprep.subr.bf16.mxu0 0
    %373 = vmatpush1.bf16.msra.mxu0 0
    %374 = vmatprep.subr.bf16.mxu0 0
    %375 = vmatpush1.bf16.msra.mxu0 0
    %376 = vmatprep.subr.bf16.mxu0 0
    %377 = vmatpush1.bf16.msra.mxu0 0
    %378 = vmatprep.subr.bf16.mxu0 0
    %379 = vmatpush1.bf16.msra.mxu0 0
    %380 = vmatprep.subr.bf16.mxu0 0
    %381 = vmatpush1.bf16.msra.mxu0 0
    %382 = vmatprep.subr.bf16.mxu0 0
    %383 = vmatpush1.bf16.msra.mxu0 0
    %384 = vmatprep.subr.bf16.mxu0 0
    %385 = vmatpush1.bf16.msra.mxu0 0
    %386 = vmatprep.subr.bf16.mxu0 0
    %387 = vmatpush1.bf16.msra.mxu0 0
    %388 = vmatprep.mubr.bf16.mxu0 0
    %389 = vmatmul.mubr.bf16.gmra.mrb[0].mxu0 %v344
    %v390 = vpop.f32.mrb[0].mxu0
    %v391 = vadd.f32 %v328, %v390
    %v392 = vpop.f32.mrb[0].mxu0
    %v393 = vadd.f32 %v329, %v392
    %v394 = vpop.f32.mrb[0].mxu0
    %v395 = vadd.f32 %v330, %v394
    %v396 = vpop.f32.mrb[0].mxu0
    %v397 = vadd.f32 %v331, %v396
    %398 = vmatprep.mubr.bf16.mxu0 0
    %399 = vmatmul.mubr.bf16.gmra.mrb[0].mxu0 %v347
    %v400 = vpop.f32.mrb[0].mxu0
    %v401 = vadd.f32 %v332, %v400
    %v402 = vpop.f32.mrb[0].mxu0
    %v403 = vadd.f32 %v333, %v402
    %v404 = vpop.f32.mrb[0].mxu0
    %v405 = vpop.f32.mrb[0].mxu0
    %406 = vdwg.mxu0
    %v407 = vmax.f32 %v391, 0.0
    %v408 = vmax.f32 %v393, 0.0
    %v409 = vmax.f32 %v395, 0.0
    %v410 = vmax.f32 %v397, 0.0
    %v411 = vmax.f32 %v401, 0.0
    %v412 = vmax.f32 %v403, 0.0
    %v413 = vpack.c.bf16 %v409, %v407
    %v414 = vpack.c.bf16 %v410, %v408
    %v415 = vpack.c.bf16 %v411, %v411
    %v416 = vpack.c.bf16 %v412, %v412
    %v417 = vld [vmem:[#allocation4] sm:$0xff]
    %v418 = vld [vmem:[#allocation4 + $0x8] sm:$0xff]
    %v419 = vld [vmem:[#allocation4 + $0x10] sm:$0xff]
    %v420 = vld [vmem:[#allocation4 + $0x18] sm:$0xff]
    %v421 = vld [vmem:[#allocation4 + $0x20] sm:$0xff]
    %v422 = vld [vmem:[#allocation4 + $0x28] sm:$0xff]
    %v423 = vld [vmem:[#allocation4 + $0x30] sm:$0xff]
    %v424 = vld [vmem:[#allocation4 + $0x38] sm:$0xff]
    %v425 = vld [vmem:[#allocation4 + $0x40] sm:$0xff]
    %v426 = vld [vmem:[#allocation4 + $0x48] sm:$0xff]
    %v427 = vld [vmem:[#allocation4 + $0x50] sm:$0xff]
    %v428 = vld [vmem:[#allocation4 + $0x58] sm:$0xff]
    %v429 = vld [vmem:[#allocation4 + $0x60] sm:$0xff]
    %v430 = vld [vmem:[#allocation4 + $0x68] sm:$0xff]
    %v431 = vld [vmem:[#allocation4 + $0x70] sm:$0xff]
    %v432 = vld [vmem:[#allocation4 + $0x78] sm:$0xff]
    %v433 = vld [vmem:[#allocation4 + $0x80] sm:$0xff]
    %v434 = vld [vmem:[#allocation4 + $0x88] sm:$0xff]
    %v435 = vld [vmem:[#allocation4 + $0x90] sm:$0xff]
    %v436 = vld [vmem:[#allocation4 + $0x98] sm:$0xff]
    %v437 = vld [vmem:[#allocation4 + $0xa0] sm:$0xff]
    %v438 = vld [vmem:[#allocation4 + $0xa8] sm:$0xff]
    %v439 = vld [vmem:[#allocation4 + $0xb0] sm:$0xff]
    %v440 = vld [vmem:[#allocation4 + $0xb8] sm:$0xff]
    %v441 = vld [vmem:[#allocation4 + $0xc0] sm:$0xff]
    %v442 = vld [vmem:[#allocation4 + $0xc8] sm:$0xff]
    %v443 = vld [vmem:[#allocation4 + $0xd0] sm:$0xff]
    %v444 = vld [vmem:[#allocation4 + $0xd8] sm:$0xff]
    %v445 = vld [vmem:[#allocation4 + $0xe0] sm:$0xff]
    %v446 = vld [vmem:[#allocation4 + $0xe8] sm:$0xff]
    %v447 = vld [vmem:[#allocation4 + $0xf0] sm:$0xff]
    %v448 = vld [vmem:[#allocation4 + $0xf8] sm:$0xff]
    %v481 = vunpack.c.l.b16 %v417
    %v482 = vunpack.c.h.b16 %v417
    %v483 = vunpack.c.l.b16 %v418
    %v484 = vunpack.c.h.b16 %v418
    %v485 = vunpack.c.l.b16 %v419
    %v486 = vunpack.c.h.b16 %v419
    %v487 = vunpack.c.l.b16 %v420
    %v488 = vunpack.c.h.b16 %v420
    %v489 = vunpack.c.l.b16 %v421
    %v490 = vunpack.c.h.b16 %v421
    %v491 = vunpack.c.l.b16 %v422
    %v492 = vunpack.c.h.b16 %v422
    %v493 = vunpack.c.l.b16 %v423
    %v494 = vunpack.c.h.b16 %v423
    %v495 = vunpack.c.l.b16 %v424
    %v496 = vunpack.c.h.b16 %v424
    %v497 = vunpack.c.l.b16 %v425
    %v498 = vunpack.c.h.b16 %v425
    %v499 = vunpack.c.l.b16 %v426
    %v500 = vunpack.c.h.b16 %v426
    %v501 = vunpack.c.l.b16 %v427
    %v502 = vunpack.c.h.b16 %v427
    %v503 = vunpack.c.l.b16 %v428
    %v504 = vunpack.c.h.b16 %v428
    %v505 = vunpack.c.l.b16 %v429
    %v506 = vunpack.c.h.b16 %v429
    %v507 = vunpack.c.l.b16 %v430
    %v508 = vunpack.c.h.b16 %v430
    %v509 = vunpack.c.l.b16 %v431
    %v510 = vunpack.c.h.b16 %v431
    %v511 = vunpack.c.l.b16 %v432
    %v512 = vunpack.c.h.b16 %v432
    %v513 = vunpack.c.l.b16 %v433
    %v514 = vunpack.c.h.b16 %v433
    %v515 = vunpack.c.l.b16 %v434
    %v516 = vunpack.c.h.b16 %v434
    %v517 = vunpack.c.l.b16 %v435
    %v518 = vunpack.c.h.b16 %v435
    %v519 = vunpack.c.l.b16 %v436
    %v520 = vunpack.c.h.b16 %v436
    %v521 = vunpack.c.l.b16 %v437
    %v522 = vunpack.c.h.b16 %v437
    %v523 = vunpack.c.l.b16 %v438
    %v524 = vunpack.c.h.b16 %v438
    %v525 = vunpack.c.l.b16 %v439
    %v526 = vunpack.c.h.b16 %v439
    %v527 = vunpack.c.l.b16 %v440
    %v528 = vunpack.c.h.b16 %v440
    %v529 = vunpack.c.l.b16 %v441
    %v530 = vunpack.c.h.b16 %v441
    %v531 = vunpack.c.l.b16 %v442
    %v532 = vunpack.c.h.b16 %v442
    %v533 = vunpack.c.l.b16 %v443
    %v534 = vunpack.c.h.b16 %v443
    %v535 = vunpack.c.l.b16 %v444
    %v536 = vunpack.c.h.b16 %v444
    %v537 = vunpack.c.l.b16 %v445
    %v538 = vunpack.c.h.b16 %v445
    %v539 = vunpack.c.l.b16 %v446
    %v540 = vunpack.c.h.b16 %v446
    %v541 = vunpack.c.l.b16 %v447
    %v542 = vunpack.c.h.b16 %v447
    %v543 = vunpack.c.l.b16 %v448
    %v544 = vunpack.c.h.b16 %v448
    %v545 = vpack.c.b16 %v483, %v481
    %v546 = vpack.c.b16 %v484, %v482
    %v547 = vpack.c.b16 %v487, %v485
    %v548 = vpack.c.b16 %v488, %v486
    %v549 = vpack.c.b16 %v491, %v489
    %v550 = vpack.c.b16 %v492, %v490
    %v551 = vpack.c.b16 %v495, %v493
    %v552 = vpack.c.b16 %v496, %v494
    %v553 = vpack.c.b16 %v499, %v497
    %v554 = vpack.c.b16 %v500, %v498
    %v555 = vpack.c.b16 %v503, %v501
    %v556 = vpack.c.b16 %v504, %v502
    %v557 = vpack.c.b16 %v507, %v505
    %v558 = vpack.c.b16 %v508, %v506
    %v559 = vpack.c.b16 %v511, %v509
    %v560 = vpack.c.b16 %v512, %v510
    %v561 = vpack.c.b16 %v515, %v513
    %v562 = vpack.c.b16 %v516, %v514
    %v563 = vpack.c.b16 %v519, %v517
    %v564 = vpack.c.b16 %v520, %v518
    %v565 = vpack.c.b16 %v523, %v521
    %v566 = vpack.c.b16 %v524, %v522
    %v567 = vpack.c.b16 %v527, %v525
    %v568 = vpack.c.b16 %v528, %v526
    %v569 = vpack.c.b16 %v531, %v529
    %v570 = vpack.c.b16 %v532, %v530
    %v571 = vpack.c.b16 %v535, %v533
    %v572 = vpack.c.b16 %v536, %v534
    %v573 = vpack.c.b16 %v539, %v537
    %v574 = vpack.c.b16 %v540, %v538
    %v575 = vpack.c.b16 %v543, %v541
    %v576 = vpack.c.b16 %v544, %v542
    %609 = vmatprep.subr.bf16.mxu0 %v546
    %610 = vmatpush1.bf16.msra.mxu0 %v545
    %611 = vmatprep.subr.bf16.mxu0 %v548
    %612 = vmatpush1.bf16.msra.mxu0 %v547
    %613 = vmatprep.subr.bf16.mxu0 %v550
    %614 = vmatpush1.bf16.msra.mxu0 %v549
    %615 = vmatprep.subr.bf16.mxu0 %v552
    %616 = vmatpush1.bf16.msra.mxu0 %v551
    %617 = vmatprep.subr.bf16.mxu0 %v554
    %618 = vmatpush1.bf16.msra.mxu0 %v553
    %619 = vmatprep.subr.bf16.mxu0 %v556
    %620 = vmatpush1.bf16.msra.mxu0 %v555
    %621 = vmatprep.subr.bf16.mxu0 %v558
    %622 = vmatpush1.bf16.msra.mxu0 %v557
    %623 = vmatprep.subr.bf16.mxu0 %v560
    %624 = vmatpush1.bf16.msra.mxu0 %v559
    %625 = vmatprep.subr.bf16.mxu0 %v562
    %626 = vmatpush1.bf16.msra.mxu0 %v561
    %627 = vmatprep.subr.bf16.mxu0 %v564
    %628 = vmatpush1.bf16.msra.mxu0 %v563
    %629 = vmatprep.subr.bf16.mxu0 %v566
    %630 = vmatpush1.bf16.msra.mxu0 %v565
    %631 = vmatprep.subr.bf16.mxu0 %v568
    %632 = vmatpush1.bf16.msra.mxu0 %v567
    %633 = vmatprep.subr.bf16.mxu0 %v570
    %634 = vmatpush1.bf16.msra.mxu0 %v569
    %635 = vmatprep.subr.bf16.mxu0 %v572
    %636 = vmatpush1.bf16.msra.mxu0 %v571
    %637 = vmatprep.subr.bf16.mxu0 %v574
    %638 = vmatpush1.bf16.msra.mxu0 %v573
    %639 = vmatprep.subr.bf16.mxu0 %v576
    %640 = vmatpush1.bf16.msra.mxu0 %v575
    %641 = vmatprep.mubr.bf16.mxu0 %v414
    %642 = vmatmul.mubr.bf16.gmra.mrb[0].mxu0 %v413
    %v643 = vpop.f32.mrb[0].mxu0
    %v644 = vadd.f32 0.0, %v643
    %v645 = vpop.f32.mrb[0].mxu0
    %v646 = vadd.f32 0.0, %v645
    %v647 = vpop.f32.mrb[0].mxu0
    %v648 = vadd.f32 0.0, %v647
    %v649 = vpop.f32.mrb[0].mxu0
    %v650 = vadd.f32 0.0, %v649
    %651 = vmatprep.mubr.bf16.mxu0 %v416
    %652 = vmatmul.mubr.bf16.gmra.mrb[0].mxu0 %v415
    %v653 = vpop.f32.mrb[0].mxu0
    %v654 = vadd.f32 0.0, %v653
    %v655 = vpop.f32.mrb[0].mxu0
    %v656 = vadd.f32 0.0, %v655
    %v657 = vpop.f32.mrb[0].mxu0
    %v658 = vpop.f32.mrb[0].mxu0
    %659 = vdwg.mxu0
    %v660 = vpack.c.bf16 %v648, %v644
    %v661 = vpack.c.bf16 %v650, %v646
    %v662 = vpack.c.bf16 %v654, %v654
    %v663 = vpack.c.bf16 %v656, %v656
    %v664 = vld [vmem:[%s5 + $0x8] sm:$0xff]
    %v665 = vld [vmem:[%s5 + $0x10] sm:$0xff]
    %v666 = vld [vmem:[%s5 + $0x20] sm:$0xff]
    %v668 = vsel %vm349, %v662, 0
    %v671 = vsel %vm349, %v663, 0
    %673 = vmatprep.subr.bf16.mxu0 %v661
    %674 = vmatpush1.bf16.msra.mxu0 %v660
    %675 = vmatprep.subr.bf16.mxu0 %v671
    %676 = vmatpush1.bf16.msra.mxu0 %v668
    %677 = vmatprep.subr.bf16.mxu0 0
    %678 = vmatpush1.bf16.msra.mxu0 0
    %679 = vmatprep.subr.bf16.mxu0 0
    %680 = vmatpush1.bf16.msra.mxu0 0
    %681 = vmatprep.subr.bf16.mxu0 0
    %682 = vmatpush1.bf16.msra.mxu0 0
    %683 = vmatprep.subr.bf16.mxu0 0
    %684 = vmatpush1.bf16.msra.mxu0 0
    %685 = vmatprep.subr.bf16.mxu0 0
    %686 = vmatpush1.bf16.msra.mxu0 0
    %687 = vmatprep.subr.bf16.mxu0 0
    %688 = vmatpush1.bf16.msra.mxu0 0
    %689 = vmatprep.subr.bf16.mxu0 0
    %690 = vmatpush1.bf16.msra.mxu0 0
    %691 = vmatprep.subr.bf16.mxu0 0
    %692 = vmatpush1.bf16.msra.mxu0 0
    %693 = vmatprep.subr.bf16.mxu0 0
    %694 = vmatpush1.bf16.msra.mxu0 0
    %695 = vmatprep.subr.bf16.mxu0 0
    %696 = vmatpush1.bf16.msra.mxu0 0
    %697 = vmatprep.subr.bf16.mxu0 0
    %698 = vmatpush1.bf16.msra.mxu0 0
    %699 = vmatprep.subr.bf16.mxu0 0
    %700 = vmatpush1.bf16.msra.mxu0 0
    %701 = vmatprep.subr.bf16.mxu0 0
    %702 = vmatpush1.bf16.msra.mxu0 0
    %703 = vmatprep.subr.bf16.mxu0 0
    %704 = vmatpush1.bf16.msra.mxu0 0
    %705 = vmatprep.mubr.bf16.mxu0 0
    %706 = vmatmul.mubr.bf16.gmra.mrb[0].mxu0 %v344
    %v707 = vpop.f32.mrb[0].mxu0
    %v708 = vpop.f32.mrb[0].mxu0
    %v709 = vadd.f32 %v664, %v708
    %v710 = vpop.f32.mrb[0].mxu0
    %v711 = vadd.f32 %v665, %v710
    %v712 = vpop.f32.mrb[0].mxu0
    %713 = vmatprep.mubr.bf16.mxu0 0
    %714 = vmatmul.mubr.bf16.gmra.mrb[0].mxu0 %v347
    %v715 = vpop.f32.mrb[0].mxu0
    %v716 = vadd.f32 %v666, %v715
    %v717 = vpop.f32.mrb[0].mxu0
    %v718 = vpop.f32.mrb[0].mxu0
    %v719 = vpop.f32.mrb[0].mxu0
    %720 = vdwg.mxu0
    %v721 = vpack.c.bf16 %v709, %v709
    %v722 = vpack.c.bf16 %v716, %v711
    %723 = vmatprep.subr.bf16.mxu0 0
    %724 = vmatpush1.bf16.xpose.msra.mxu0 %v722
    %725 = vmatprep.subr.bf16.mxu0 0
    %726 = vmatpush1.bf16.xpose.msra.mxu0 0
    %727 = vmatprep.subr.bf16.mxu0 0
    %728 = vmatpush1.bf16.xpose.msra.mxu0 0
    %729 = vmatprep.subr.bf16.mxu0 0
    %730 = vmatpush1.bf16.xpose.msra.mxu0 0
    %731 = vmatprep.subr.bf16.mxu0 0
    %732 = vmatpush1.bf16.xpose.msra.mxu0 0
    %733 = vmatprep.subr.bf16.mxu0 0
    %734 = vmatpush1.bf16.xpose.msra.mxu0 0
    %735 = vmatprep.subr.bf16.mxu0 0
    %736 = vmatpush1.bf16.xpose.msra.mxu0 0
    %737 = vmatprep.subr.bf16.mxu0 0
    %738 = vmatpush1.bf16.xpose.msra.mxu0 0
    %739 = vmatprep.subr.bf16.mxu0 0
    %740 = vmatpush1.bf16.xpose.msra.mxu0 0
    %741 = vmatprep.subr.bf16.mxu0 0
    %742 = vmatpush1.bf16.xpose.msra.mxu0 0
    %743 = vmatprep.subr.bf16.mxu0 0
    %744 = vmatpush1.bf16.xpose.msra.mxu0 0
    %745 = vmatprep.subr.bf16.mxu0 0
    %746 = vmatpush1.bf16.xpose.msra.mxu0 0
    %747 = vmatprep.subr.bf16.mxu0 0
    %748 = vmatpush1.bf16.xpose.msra.mxu0 0
    %749 = vmatprep.subr.bf16.mxu0 0
    %750 = vmatpush1.bf16.xpose.msra.mxu0 0
    %751 = vmatprep.subr.bf16.mxu0 0
    %752 = vmatpush1.bf16.xpose.msra.mxu0 0
    %753 = vmatprep.subr.bf16.mxu0 0
    %754 = vmatpush1.bf16.xpose.msra.mxu0 0
    %755 = vmatprep.mubr.bf16.mxu0 0
    %756 = vmatmul.mubr.bf16.gmra.mrb[0].mxu0 %v721
    %v757 = vpop.f32.mrb[0].mxu0
    %v758 = vadd.f32 0.0, %v757
    %v759 = vpop.f32.mrb[0].mxu0
    %v760 = vpop.f32.mrb[0].mxu0
    %v761 = vpop.f32.mrb[0].mxu0
    %762 = vdwg.mxu0
    %v763 = vlaneseq
    %v764 = vshrl.u32 %v763, 7
    %v765 = vadd.s32 %v764, 8
    %v766 = vld [vmem:[%s7] sm:$0x3]
    %v767 = vlaneseq
    %v768 = vshrl.u32 %v767, 7
    %v769 = vsub.s32 0, %v768
    %v770 = vrot.slane %v766, %v769
    %v771 = vlaneseq
    %v772 = vshrl.u32 %v771, 7
    %v773 = vsub.s32 1, %v772
    %v774 = vrot.slane %v766, %v773
    %vm775 = vcmp.eq.s32.totalorder %v764, %v770
    %vm776 = vcmp.eq.s32.totalorder %v764, %v774
    %vm777 = vcmp.eq.s32.totalorder %v765, %v770
    %vm778 = vcmp.eq.s32.totalorder %v765, %v774
    %v779 = vsel %vm775, 1, 0
    %v780 = vsel %vm776, 1, 0
    %v781 = vsel %vm777, 1, 0
    %v782 = vsel %vm778, 1, 0
    %v783 = vcvt.s32.f32 %v779
    %v784 = vcvt.s32.f32 %v780
    %v785 = vcvt.s32.f32 %v781
    %v786 = vcvt.s32.f32 %v782
    %v787 = vpack.c.bf16 %v785, %v783
    %v788 = vpack.c.bf16 %v786, %v784
    %v789 = vld [vmem:[%s6] sm:$0x3]
    %v790 = vlaneseq
    %v791 = vshrl.u32 %v790, 7
    %v792 = vsub.s32 0, %v791
    %v793 = vrot.slane %v789, %v792
    %v794 = vlaneseq
    %v795 = vshrl.u32 %v794, 7
    %v796 = vsub.s32 1, %v795
    %v797 = vrot.slane %v789, %v796
    %vm798 = vcmp.eq.s32.totalorder %v764, %v793
    %vm799 = vcmp.eq.s32.totalorder %v764, %v797
    %v800 = vsel %vm798, 1, 0
    %v801 = vsel %vm799, 1, 0
    %v802 = vcvt.s32.f32 %v800
    %v803 = vcvt.s32.f32 %v801
    %v804 = vpack.c.bf16 %v758, %v758
    %vm805 = vcmask 130048
    %v807 = vsel %vm805, %v804, 0
    %809 = vmatprep.subr.bf16.mxu0 %v788
    %810 = vmatpush1.bf16.msra.mxu0 %v787
    %811 = vmatprep.subr.bf16.mxu0 0
    %812 = vmatpush1.bf16.msra.mxu0 0
    %813 = vmatprep.subr.bf16.mxu0 0
    %814 = vmatpush1.bf16.msra.mxu0 0
    %815 = vmatprep.subr.bf16.mxu0 0
    %816 = vmatpush1.bf16.msra.mxu0 0
    %817 = vmatprep.subr.bf16.mxu0 0
    %818 = vmatpush1.bf16.msra.mxu0 0
    %819 = vmatprep.subr.bf16.mxu0 0
    %820 = vmatpush1.bf16.msra.mxu0 0
    %821 = vmatprep.subr.bf16.mxu0 0
    %822 = vmatpush1.bf16.msra.mxu0 0
    %823 = vmatprep.subr.bf16.mxu0 0
    %824 = vmatpush1.bf16.msra.mxu0 0
    %825 = vmatprep.subr.bf16.mxu0 0
    %826 = vmatpush1.bf16.msra.mxu0 0
    %827 = vmatprep.subr.bf16.mxu0 0
    %828 = vmatpush1.bf16.msra.mxu0 0
    %829 = vmatprep.subr.bf16.mxu0 0
    %830 = vmatpush1.bf16.msra.mxu0 0
    %831 = vmatprep.subr.bf16.mxu0 0
    %832 = vmatpush1.bf16.msra.mxu0 0
    %833 = vmatprep.subr.bf16.mxu0 0
    %834 = vmatpush1.bf16.msra.mxu0 0
    %835 = vmatprep.subr.bf16.mxu0 0
    %836 = vmatpush1.bf16.msra.mxu0 0
    %837 = vmatprep.subr.bf16.mxu0 0
    %838 = vmatpush1.bf16.msra.mxu0 0
    %839 = vmatprep.subr.bf16.mxu0 0
    %840 = vmatpush1.bf16.msra.mxu0 0
    %841 = vmatprep.mubr.bf16.mxu0 0
    %842 = vmatmul.mubr.bf16.gmra.mrb[0].mxu0 %v807
    %v843 = vpop.f32.mrb[0].mxu0
    %v844 = vadd.f32 0.0, %v843
    %v845 = vpop.f32.mrb[0].mxu0
    %v846 = vadd.f32 0.0, %v845
    %v847 = vpop.f32.mrb[0].mxu0
    %v848 = vpop.f32.mrb[0].mxu0
    %849 = vdwg.mxu0
    %v850 = vmul.f32 %v802, %v844
    %v851 = vmul.f32 %v803, %v846
    %v852 = vrot.slane %v850, 4
    %v853 = vadd.f32 %v850, %v852
    %v854 = vrot.slane %v853, 2
    %v855 = vadd.f32 %v853, %v854
    %v856 = vrot.slane %v855, 1
    %v857 = vadd.f32 %v855, %v856
    %v858 = vrot.slane %v851, 4
    %v859 = vadd.f32 %v851, %v858
    %v860 = vrot.slane %v859, 2
    %v861 = vadd.f32 %v859, %v860
    %v862 = vrot.slane %v861, 1
    %v863 = vadd.f32 %v861, %v862
    %v866 = vcombine.low %v857, %v863
    %v868 = vunpack.c.l.s4 1966171168
    %v869 = vunpack.c.0.s8 %v868
    %v870 = vlaneseq
    %v871 = vshrl.u32 %v870, 7
    %v872 = vsub.s32 %v869, %v871
    %v873 = vrot.slane %v866, %v872
    %v875 = vunpack.c.l.s4 1966171168
    %v876 = vunpack.c.0.s8 %v875
    %v877 = vlaneseq
    %v878 = vshrl.u32 %v877, 7
    %v879 = vsub.s32 %v876, %v878
    %v880 = vrot.slane %v873, %v879
    %v882 = vlaneseq
    %vm883 = vcmp.ge.s32.totalorder %v882, 0
    %vm884 = vcmp.lt.s32.totalorder %v882, 256
    %vm885 = vmand %vm883, %vm884
    %886 = vst.msk [vmem:[%s8] sm:$0x3] %vm885, %v880
    // Predicated region
    $region42: #{model_forward.1} parent=1 // pred_check
      _
    $region43: #{model_forward.1} parent=1 // pred_check_branch
      %888 = sbr.rel (0) target = $region45
    $region44: #{model_forward.1} parent=1 // pred_region
      _
    $region45: #{model_forward.1} parent=1 // pred_fallthru
      _
    // Predicated region
    $region46: #{model_forward.1} parent=1 // pred_check
      _
    $region47: #{model_forward.1} parent=1 // pred_check_branch
      %890 = sbr.rel (0) target = $region49
    $region48: #{model_forward.1} parent=1 // pred_region
      _
    $region49: #{model_forward.1} parent=1 // pred_fallthru
      _
    %891 = vsyncpa [#allocation3], 1
    %892 = vsyncpa [#allocation5], 1

</llo_original>
